<compile_context>
chip_gen: v5e
topology: v5e:2x2
jax: 0.10.0
libtpu: 0.0.40
codegen_flags: <defaults>
</compile_context>

<pallas_src>
import functools

import jax
import jax.numpy as jnp
from jax.experimental import pallas as pl
from jax.experimental.pallas import tpu as pltpu


# Per in/out tile target, measured on the f32 compute copy (kernel upcasts).
_TARGET_TILE_BYTES_F32 = 4 * 1024 * 1024
# 2x in-tile + 2x out-tile double buffering + ~3x f32-tile intermediates stays
# well under this; 48 MiB leaves headroom under v7x's 64 MiB physical VMEM and
# is trivially fine on v5e/v6e (128 MiB physical).
_VMEM_LIMIT_BYTES = 48 * 1024 * 1024


# ---------------------------------------------------------------------------
# channels_last: rows = flatten(leading dims), reduce over C on the lane axis.
# ---------------------------------------------------------------------------
def _layernorm_cl_kernel(x_ref, w_ref, b_ref, o_ref, *, eps):
    # x_ref: (block_rows, C) -- C is the full (lane) feature dim, reduce over it.
    x = x_ref[...].astype(jnp.float32)
    mean = jnp.mean(x, axis=-1, keepdims=True)
    xc = x - mean
    var = jnp.mean(xc * xc, axis=-1, keepdims=True)   # biased var (F.layer_norm)
    inv = jax.lax.rsqrt(var + eps)                     # EUP slot, VALU stays free
    y = (xc * inv) * w_ref[...] + b_ref[...]           # w/b (1, C) broadcast
    o_ref[...] = y.astype(o_ref.dtype)


def _pick_block_rows(n_rows, n_cols):
    """Rows per grid step, sized so the f32 tile is ~_TARGET_TILE_BYTES_F32."""
    if n_rows * n_cols * 4 <= _TARGET_TILE_BYTES_F32:
        return n_rows                                   # whole thing in one step
    if n_rows < 8:
        return n_rows                                   # full (second-to-last) dim
    cap = max(8, (_TARGET_TILE_BYTES_F32 // (n_cols * 4)) // 8 * 8)
    return max(8, min((n_rows // 8) * 8, cap))


def _layer_norm_channels_last(x, weight, bias, eps, block_rows=None):
    orig_shape = x.shape
    C = orig_shape[-1]
    n_rows = 1
    for d in orig_shape[:-1]:
        n_rows *= int(d)
    x2 = x.reshape(n_rows, C)

    if block_rows is None:
        block_rows = _pick_block_rows(n_rows, C)
    grid = (pl.cdiv(n_rows, block_rows),)

    w2 = weight.reshape(1, C).astype(jnp.float32)
    b2 = bias.reshape(1, C).astype(jnp.float32)

    cost = pl.CostEstimate(
        flops=7 * n_rows * C,
        transcendentals=n_rows,
        bytes_accessed=2 * x2.size * x2.dtype.itemsize + 2 * C * 4,
    )

    out2 = pl.pallas_call(
        functools.partial(_layernorm_cl_kernel, eps=float(eps)),
        out_shape=jax.ShapeDtypeStruct((n_rows, C), x.dtype),
        grid_spec=pltpu.PrefetchScalarGridSpec(
            num_scalar_prefetch=0,
            grid=grid,
            in_specs=[
                pl.BlockSpec((block_rows, C), lambda i: (i, 0)),
                pl.BlockSpec((1, C), lambda i: (0, 0)),
                pl.BlockSpec((1, C), lambda i: (0, 0)),
            ],
            out_specs=pl.BlockSpec((block_rows, C), lambda i: (i, 0)),
        ),
        compiler_params=pltpu.CompilerParams(
            dimension_semantics=("parallel",),
            vmem_limit_bytes=_VMEM_LIMIT_BYTES,
        ),
        cost_estimate=cost,
    )(x2, w2, b2)
    return out2.reshape(orig_shape)


# ---------------------------------------------------------------------------
# channels_first: x (N, C, H*W), C on sublanes (reduce axis), H*W on lanes.
# No wrapper transpose -> HBM traffic is exactly read-x + write-y.
# ---------------------------------------------------------------------------
def _layernorm_cf_kernel(x_ref, w_ref, b_ref, o_ref, *, eps):
    # x_ref: (1, C, hw_block) -- reduce over the channel (sublane) axis.
    x = x_ref[...].astype(jnp.float32)
    mean = jnp.mean(x, axis=1, keepdims=True)
    xc = x - mean
    var = jnp.mean(xc * xc, axis=1, keepdims=True)
    inv = jax.lax.rsqrt(var + eps)
    y = (xc * inv) * w_ref[...] + b_ref[...]           # w/b (1, C, 1) broadcast
    o_ref[...] = y.astype(o_ref.dtype)


def _pick_hw_block(hw, n_ch):
    """Lane-axis block size: multiple of 128 (or full H*W), ~4 MiB f32 tile."""
    if hw <= 128 or hw * n_ch * 4 <= _TARGET_TILE_BYTES_F32:
        return hw
    cap = max(128, (_TARGET_TILE_BYTES_F32 // (n_ch * 4)) // 128 * 128)
    return max(128, min((hw // 128) * 128, cap))


def _layer_norm_channels_first(x, weight, bias, eps, hw_block=None):
    N, C, H, W = x.shape
    HW = H * W
    x3 = x.reshape(N, C, HW)                            # contiguous, free reshape

    if hw_block is None:
        hw_block = _pick_hw_block(HW, C)
    grid = (N, pl.cdiv(HW, hw_block))

    w3 = weight.reshape(1, C, 1).astype(jnp.float32)
    b3 = bias.reshape(1, C, 1).astype(jnp.float32)

    cost = pl.CostEstimate(
        flops=7 * N * C * HW,
        transcendentals=N * HW,
        bytes_accessed=2 * x3.size * x3.dtype.itemsize + 2 * C * 4,
    )

    out3 = pl.pallas_call(
        functools.partial(_layernorm_cf_kernel, eps=float(eps)),
        out_shape=jax.ShapeDtypeStruct((N, C, HW), x.dtype),
        grid_spec=pltpu.PrefetchScalarGridSpec(
            num_scalar_prefetch=0,
            grid=grid,
            in_specs=[
                pl.BlockSpec((1, C, hw_block), lambda n, j: (n, 0, j)),
                pl.BlockSpec((1, C, 1), lambda n, j: (0, 0, 0)),
                pl.BlockSpec((1, C, 1), lambda n, j: (0, 0, 0)),
            ],
            out_specs=pl.BlockSpec((1, C, hw_block), lambda n, j: (n, 0, j)),
        ),
        compiler_params=pltpu.CompilerParams(
            dimension_semantics=("parallel", "parallel"),
            vmem_limit_bytes=_VMEM_LIMIT_BYTES,
        ),
        cost_estimate=cost,
    )(x3, w3, b3)
    return out3.reshape(N, C, H, W)


# ---------------------------------------------------------------------------
# Public entry point (matches the PyTorch module's forward).
# ---------------------------------------------------------------------------
def layer_norm(x, weight, bias, *, eps=1e-6, data_format="channels_last"):
    """LayerNorm matching the PyTorch module.

    channels_last : x (..., C), weight/bias (C,)
    channels_first: x (N, C, H, W), weight/bias (C,)
    """
    if data_format not in ("channels_last", "channels_first"):
        raise NotImplementedError(data_format)
    C = x.shape[-1] if data_format == "channels_last" else x.shape[1]
    assert weight.shape == (C,) and bias.shape == (C,)

    if data_format == "channels_last":
        return _layer_norm_channels_last(x, weight, bias, eps)
    return _layer_norm_channels_first(x, weight, bias, eps)


def layer_norm_ref(x, weight, bias, eps=1e-6, data_format="channels_last"):
    """Pure-JAX reference of the PyTorch forward."""
    if data_format == "channels_last":
        mean = jnp.mean(x, axis=-1, keepdims=True)
        var = jnp.mean((x - mean) ** 2, axis=-1, keepdims=True)
        xn = (x - mean) / jnp.sqrt(var + eps)
        return xn * weight + bias
    else:
        mean = jnp.mean(x, axis=1, keepdims=True)
        var = jnp.mean((x - mean) ** 2, axis=1, keepdims=True)
        xn = (x - mean) / jnp.sqrt(var + eps)
        return weight[None, :, None, None] * xn + bias[None, :, None, None]


if __name__ == "__main__":
    key = jax.random.PRNGKey(0)
    k1, k2, k3, k4, k5, k6 = jax.random.split(key, 6)

    # ---- channels_last: (batch, seq, hidden) = (2, 16, 128) ----
    C1 = 128
    x_cl = jax.random.normal(k1, (2, 16, C1), jnp.float32)
    w_cl = 1.0 + 0.1 * jax.random.normal(k2, (C1,), jnp.float32)
    b_cl = 0.1 * jax.random.normal(k3, (C1,), jnp.float32)

    out_cl = layer_norm(x_cl, w_cl, b_cl, eps=1e-6, data_format="channels_last")
    out_cl = jax.block_until_ready(out_cl)
    ref_cl = layer_norm_ref(x_cl, w_cl, b_cl, 1e-6, "channels_last")
    assert out_cl.shape == x_cl.shape
    assert jnp.allclose(out_cl, ref_cl, atol=1e-4, rtol=1e-4), "channels_last mismatch"

    # ---- channels_first: (N, C, H, W) = (2, 32, 8, 8) ----
    C2 = 32
    x_cf = jax.random.normal(k4, (2, C2, 8, 8), jnp.float32)
    w_cf = 1.0 + 0.1 * jax.random.normal(k5, (C2,), jnp.float32)
    b_cf = 0.1 * jax.random.normal(k6, (C2,), jnp.float32)

    out_cf = layer_norm(x_cf, w_cf, b_cf, eps=1e-6, data_format="channels_first")
    out_cf = jax.block_until_ready(out_cf)
    ref_cf = layer_norm_ref(x_cf, w_cf, b_cf, 1e-6, "channels_first")
    assert out_cf.shape == x_cf.shape
    assert jnp.allclose(out_cf, ref_cf, atol=1e-4, rtol=1e-4), "channels_first mismatch"

    print("KERNEL_OK")
</pallas_src>

<mosaic_0001>
module attributes {stable_mosaic.version = 11 : i64} {
  func.func @_layernorm_cl_kernel(%arg0: i32, %arg1: memref<32x128xf32, #tpu.memory_space<vmem>>, %arg2: memref<1x128xf32, #tpu.memory_space<vmem>>, %arg3: memref<1x128xf32, #tpu.memory_space<vmem>>, %arg4: memref<32x128xf32, #tpu.memory_space<vmem>>) attributes {dimension_semantics = [#tpu.dimension_semantics<parallel>], iteration_bounds = array<i64: 1>, scalar_prefetch = 0 : i64, scratch_operands = 0 : i64, tpu.core_type = #tpu.core_type<tc>, window_params = [{transform_indices = @transform_0, window_bounds = array<i64: 32, 128>}, {pipeline_mode = #tpu.pipeline_mode<synchronous>, transform_indices = @transform_1, window_bounds = array<i64: 1, 128>}, {pipeline_mode = #tpu.pipeline_mode<synchronous>, transform_indices = @transform_2, window_bounds = array<i64: 1, 128>}, {transform_indices = @transform_3, window_bounds = array<i64: 32, 128>}]} {
    %c0 = arith.constant 0 : index
    %c0_0 = arith.constant 0 : index
    %0 = vector.load %arg1[%c0, %c0_0] : memref<32x128xf32, #tpu.memory_space<vmem>>, vector<32x128xf32>
    %cst = arith.constant dense<0.000000e+00> : vector<32xf32>
    %1 = vector.multi_reduction <add>, %0, %cst [1] : vector<32x128xf32> to vector<32xf32>
    %2 = vector.shape_cast %1 : vector<32xf32> to vector<32x1xf32>
    %cst_1 = arith.constant 1.280000e+02 : f32
    %3 = vector.broadcast %cst_1 : f32 to vector<32x1xf32>
    %4 = arith.divf %2, %3 : vector<32x1xf32>
    %5 = vector.broadcast %4 : vector<32x1xf32> to vector<32x128xf32>
    %6 = arith.subf %0, %5 : vector<32x128xf32>
    %7 = arith.mulf %6, %6 : vector<32x128xf32>
    %cst_2 = arith.constant dense<0.000000e+00> : vector<32xf32>
    %8 = vector.multi_reduction <add>, %7, %cst_2 [1] : vector<32x128xf32> to vector<32xf32>
    %9 = vector.shape_cast %8 : vector<32xf32> to vector<32x1xf32>
    %cst_3 = arith.constant 1.280000e+02 : f32
    %10 = vector.broadcast %cst_3 : f32 to vector<32x1xf32>
    %11 = arith.divf %9, %10 : vector<32x1xf32>
    %cst_4 = arith.constant 9.99999997E-7 : f32
    %12 = vector.broadcast %cst_4 : f32 to vector<32x1xf32>
    %13 = arith.addf %11, %12 : vector<32x1xf32>
    %14 = math.rsqrt %13 : vector<32x1xf32>
    %15 = vector.broadcast %14 : vector<32x1xf32> to vector<32x128xf32>
    %16 = arith.mulf %6, %15 : vector<32x128xf32>
    %c0_5 = arith.constant 0 : index
    %c0_6 = arith.constant 0 : index
    %17 = vector.load %arg2[%c0_5, %c0_6] : memref<1x128xf32, #tpu.memory_space<vmem>>, vector<1x128xf32>
    %18 = vector.broadcast %17 : vector<1x128xf32> to vector<32x128xf32>
    %19 = arith.mulf %16, %18 : vector<32x128xf32>
    %c0_7 = arith.constant 0 : index
    %c0_8 = arith.constant 0 : index
    %20 = vector.load %arg3[%c0_7, %c0_8] : memref<1x128xf32, #tpu.memory_space<vmem>>, vector<1x128xf32>
    %21 = vector.broadcast %20 : vector<1x128xf32> to vector<32x128xf32>
    %22 = arith.addf %19, %21 : vector<32x128xf32>
    %c0_9 = arith.constant 0 : index
    %c0_10 = arith.constant 0 : index
    %23 = vector.load %arg4[%c0_9, %c0_10] : memref<32x128xf32, #tpu.memory_space<vmem>>, vector<32x128xf32>
    tpu.vector_store %arg4[%c0_9, %c0_10], %22 {strides = array<i32>} : memref<32x128xf32, #tpu.memory_space<vmem>>, vector<32x128xf32>,
    return
  }
  func.func @transform_0(%arg0: i32) -> (i32, i32) {
    %c0_i32 = arith.constant 0 : i32
    %c0_i32_0 = arith.constant 0 : i32
    return %arg0, %c0_i32 : i32, i32
  }
  func.func @transform_1(%arg0: i32) -> (i32, i32) {
    %c0_i32 = arith.constant 0 : i32
    %c0_i32_0 = arith.constant 0 : i32
    %c0_i32_1 = arith.constant 0 : i32
    return %c0_i32, %c0_i32_0 : i32, i32
  }
  func.func @transform_2(%arg0: i32) -> (i32, i32) {
    %c0_i32 = arith.constant 0 : i32
    %c0_i32_0 = arith.constant 0 : i32
    %c0_i32_1 = arith.constant 0 : i32
    return %c0_i32, %c0_i32_0 : i32, i32
  }
  func.func @transform_3(%arg0: i32) -> (i32, i32) {
    %c0_i32 = arith.constant 0 : i32
    %c0_i32_0 = arith.constant 0 : i32
    return %arg0, %c0_i32 : i32, i32
  }
}

</mosaic_0001>

<llo_original>
// kernel: tpu_custom_call.1
$region0: #{tpu_custom_call.1}
  #allocation0 [shape = 'u32[]', space=smem, size = 0x4, offset = 0x4, fixed_abs, tag = 'smem constant byte address 0x4 - core index']
  #allocation1 [shape = 'u32[72,128]{1,0:T(1,128)}', space=vmem, size = 0x9000, scoped, tag = 'internal scratch']
  %s0 = inlined_call_operand.hbm [shape: f32[32,128], index: 0, kind: input, shape index: {}]
  %s1 = inlined_call_operand.hbm [shape: f32[1,128], index: 1, kind: input, shape index: {}]
  %s2 = inlined_call_operand.vmem [shape: f32[1,128], index: 2, kind: input, shape index: {}]
  %s3 = inlined_call_operand.hbm [shape: f32[32,128], index: 3, kind: output, shape index: {}]
  %s4 = sld [smem:[#allocation0]]
  $region30: #{tpu_custom_call.1} parent=0
    _
  %s6 = ssub.s32 1, %s4
  %s7 = scalar_select 0, %s6, %s4
  $region1: #{tpu_custom_call.1} parent=0
    #allocation2 [shape = 'u8[16384]{0}', space=vmem, size = 0x4000, scoped, tag = 'input window, operand 0, single buffered']
    #allocation3 [shape = 's32[1]{0}', space=sflag, size = 0x4, scoped, tag = 'scoped memory for tpu_custom_call.1']
    #allocation4 [shape = 's32[1]{0}', space=sflag, size = 0x4, scoped, tag = 'scoped memory for tpu_custom_call.1']
    #allocation5 [shape = 'u8[512]{0}', space=vmem, size = 0x400, scoped, tag = 'input window, operand 1, single buffered']
    #allocation6 [shape = 's32[1]{0}', space=sflag, size = 0x4, scoped, tag = 'scoped memory for tpu_custom_call.1']
    #allocation7 [shape = 'u8[16384]{0}', space=vmem, size = 0x4000, scoped, tag = 'output window, operand 0, single buffered']
    %8 = vsyncpa [#allocation3], 0
    %9 = vsyncpa [#allocation6], 0
    %10 = vsyncpa [#allocation4], 0
    // Predicated region
    $region2: #{tpu_custom_call.1} parent=1 // pred_check
      _
    $region3: #{tpu_custom_call.1} parent=1 // pred_check_branch
      %12 = sbr.rel (0) target = $region5
    $region4: #{tpu_custom_call.1} parent=1 // pred_region
      %14 = vsyncadd [#allocation3], 0
      %s15 = sshll.u32 %s0, 4
      %s16 = int_to_ptr.hbm [resolvable:$true] %s15
      %s17 = sshll.u32 [#allocation2], 4
      %s18 = int_to_ptr.vmem [resolvable:$true] %s17
      %23 = dma.hbm_to_vmem [thread:$0]  %s16, 512, %s18, [#allocation3], 128, 128, 8
    $region5: #{tpu_custom_call.1} parent=1 // pred_fallthru
      _
    // Predicated region
    $region6: #{tpu_custom_call.1} parent=1 // pred_check
      _
    $region7: #{tpu_custom_call.1} parent=1 // pred_check_branch
      %25 = sbr.rel (0) target = $region9
    $region8: #{tpu_custom_call.1} parent=1 // pred_region
      %27 = vsyncadd [#allocation6], 0
      %s29 = sshll.u32 %s1, 4
      %s30 = int_to_ptr.hbm [resolvable:$true] %s29
      %s31 = sshll.u32 [#allocation5], 4
      %s32 = int_to_ptr.vmem [resolvable:$true] %s31
      %34 = dma.hbm_to_vmem [thread:$0]  %s30, 16, %s32, [#allocation6]
    $region9: #{tpu_custom_call.1} parent=1 // pred_fallthru
      _
    // Predicated region
    $region10: #{tpu_custom_call.1} parent=1 // pred_check
      _
    $region11: #{tpu_custom_call.1} parent=1 // pred_check_branch
      %36 = sbr.rel (0) target = $region13
    $region12: #{tpu_custom_call.1} parent=1 // pred_region
      _
    $region13: #{tpu_custom_call.1} parent=1 // pred_fallthru
      _
    // Predicated region
    $region14: #{tpu_custom_call.1} parent=1 // pred_check
      _
    $region15: #{tpu_custom_call.1} parent=1 // pred_check_branch
      %38 = sbr.rel (0) target = $region17
    $region16: #{tpu_custom_call.1} parent=1 // pred_region
      %40 = dma.done [#allocation3], 512
    $region17: #{tpu_custom_call.1} parent=1 // pred_fallthru
      _
    // Predicated region
    $region18: #{tpu_custom_call.1} parent=1 // pred_check
      _
    $region19: #{tpu_custom_call.1} parent=1 // pred_check_branch
      %42 = sbr.rel (0) target = $region21
    $region20: #{tpu_custom_call.1} parent=1 // pred_region
      %44 = dma.done [#allocation6], 16
    $region21: #{tpu_custom_call.1} parent=1 // pred_fallthru
      _
    %v45 = vld [vmem:[#allocation2] sm:$0xff]
    %v46 = vld [vmem:[#allocation2 + $0x8] sm:$0xff]
    %v47 = vld [vmem:[#allocation2 + $0x10] sm:$0xff]
    %v48 = vld [vmem:[#allocation2 + $0x18] sm:$0xff]
    %49 = vadd.xlane.f32.xlu0 %v45
    %v50 = vpop.xlane.xlu0 %49
    %51 = vadd.xlane.f32.xlu0 %v46
    %v52 = vpop.xlane.xlu0 %51
    %53 = vadd.xlane.f32.xlu0 %v47
    %v54 = vpop.xlane.xlu0 %53
    %55 = vadd.xlane.f32.xlu0 %v48
    %v56 = vpop.xlane.xlu0 %55
    %v57 = vrcp.pop 128.0
    %v58 = vmul.f32 128.0, %v57
    %v59 = vsub.f32 1.0, %v58
    %v60 = vmul.f32 %v57, %v59
    %v61 = vadd.f32 %v57, %v60
    %vm62 = vweird.f32 %v57
    %v63 = vsel %vm62, %v57, %v61
    %v64 = vmul.f32 %v50, %v63
    %v65 = vmul.f32 %v52, %v63
    %v66 = vmul.f32 %v54, %v63
    %v67 = vmul.f32 %v56, %v63
    %v68 = vsub.f32 %v45, %v64
    %v69 = vsub.f32 %v46, %v65
    %v70 = vsub.f32 %v47, %v66
    %v71 = vsub.f32 %v48, %v67
    %v72 = vmul.f32 %v68, %v68
    %v73 = vmul.f32 %v69, %v69
    %v74 = vmul.f32 %v70, %v70
    %v75 = vmul.f32 %v71, %v71
    %76 = vadd.xlane.f32.xlu0 %v72
    %v77 = vpop.xlane.xlu0 %76
    %78 = vadd.xlane.f32.xlu0 %v73
    %v79 = vpop.xlane.xlu0 %78
    %80 = vadd.xlane.f32.xlu0 %v74
    %v81 = vpop.xlane.xlu0 %80
    %82 = vadd.xlane.f32.xlu0 %v75
    %v83 = vpop.xlane.xlu0 %82
    %v84 = vmul.f32 %v77, %v63
    %v85 = vmul.f32 %v79, %v63
    %v86 = vmul.f32 %v81, %v63
    %v87 = vmul.f32 %v83, %v63
    %v88 = vadd.f32 %v84, 1e-06
    %v89 = vadd.f32 %v85, 1e-06
    %v90 = vadd.f32 %v86, 1e-06
    %v91 = vadd.f32 %v87, 1e-06
    %v92 = vrsqrt.pop %v88
    %v93 = vmul.f32 %v92, %v88
    %v94 = vmul.f32 %v93, %v92
    %v95 = vmul.f32 0.5, %v94
    %v96 = vsub.f32 1.5, %v95
    %v97 = vmul.f32 %v92, %v96
    %vm98 = vweird.f32 %v88
    %vm99 = vweird.f32 %v92
    %vm100 = vmor %vm98, %vm99
    %v101 = vsel %vm100, %v92, %v97
    %v102 = vrsqrt.pop %v89
    %v103 = vmul.f32 %v102, %v89
    %v104 = vmul.f32 %v103, %v102
    %v105 = vmul.f32 0.5, %v104
    %v106 = vsub.f32 1.5, %v105
    %v107 = vmul.f32 %v102, %v106
    %vm108 = vweird.f32 %v89
    %vm109 = vweird.f32 %v102
    %vm110 = vmor %vm108, %vm109
    %v111 = vsel %vm110, %v102, %v107
    %v112 = vrsqrt.pop %v90
    %v113 = vmul.f32 %v112, %v90
    %v114 = vmul.f32 %v113, %v112
    %v115 = vmul.f32 0.5, %v114
    %v116 = vsub.f32 1.5, %v115
    %v117 = vmul.f32 %v112, %v116
    %vm118 = vweird.f32 %v90
    %vm119 = vweird.f32 %v112
    %vm120 = vmor %vm118, %vm119
    %v121 = vsel %vm120, %v112, %v117
    %v122 = vrsqrt.pop %v91
    %v123 = vmul.f32 %v122, %v91
    %v124 = vmul.f32 %v123, %v122
    %v125 = vmul.f32 0.5, %v124
    %v126 = vsub.f32 1.5, %v125
    %v127 = vmul.f32 %v122, %v126
    %vm128 = vweird.f32 %v91
    %vm129 = vweird.f32 %v122
    %vm130 = vmor %vm128, %vm129
    %v131 = vsel %vm130, %v122, %v127
    %v132 = vmul.f32 %v68, %v101
    %v133 = vmul.f32 %v69, %v111
    %v134 = vmul.f32 %v70, %v121
    %v135 = vmul.f32 %v71, %v131
    %v136 = vld [vmem:[#allocation5] sm:$0x1]
    %v138 = vperm.slane %v136, 0
    %v140 = vmul.f32 %v132, %v138
    %v141 = vmul.f32 %v133, %v138
    %v142 = vmul.f32 %v134, %v138
    %v143 = vmul.f32 %v135, %v138
    %v144 = vld [vmem:[%s2] sm:$0x1]
    %v146 = vperm.slane %v144, 0
    %v148 = vadd.f32 %v140, %v146
    %v149 = vadd.f32 %v141, %v146
    %v150 = vadd.f32 %v142, %v146
    %v151 = vadd.f32 %v143, %v146
    %152 = vst [vmem:[#allocation7] sm:$0xff] %v148
    %153 = vst [vmem:[#allocation7 + $0x8] sm:$0xff] %v149
    %154 = vst [vmem:[#allocation7 + $0x10] sm:$0xff] %v150
    %155 = vst [vmem:[#allocation7 + $0x18] sm:$0xff] %v151
    // Predicated region
    $region22: #{tpu_custom_call.1} parent=1 // pred_check
      _
    $region23: #{tpu_custom_call.1} parent=1 // pred_check_branch
      %157 = sbr.rel (0) target = $region25
    $region24: #{tpu_custom_call.1} parent=1 // pred_region
      %159 = vsyncadd [#allocation4], 0
      %s160 = sshll.u32 [#allocation7], 4
      %s161 = int_to_ptr.vmem [resolvable:$true] %s160
      %s162 = sshll.u32 %s3, 4
      %s163 = int_to_ptr.hbm [resolvable:$true] %s162
      %168 = dma.vmem_to_hbm [thread:$0]  %s161, 512, %s163, [#allocation4], 128, 128, 8
    $region25: #{tpu_custom_call.1} parent=1 // pred_fallthru
      _
    // Predicated region
    $region26: #{tpu_custom_call.1} parent=1 // pred_check
      _
    $region27: #{tpu_custom_call.1} parent=1 // pred_check_branch
      %170 = sbr.rel (0) target = $region29
    $region28: #{tpu_custom_call.1} parent=1 // pred_region
      %172 = dma.done [#allocation4], 512
    $region29: #{tpu_custom_call.1} parent=1 // pred_fallthru
      _
    %173 = vsyncpa [#allocation3], 1
    %174 = vsyncpa [#allocation6], 1
    %175 = vsyncpa [#allocation4], 1

</llo_original>
